<compile_context>
chip_gen: v7x
topology: tpu7x:2x2x1
jax: 0.10.0
libtpu: 0.0.40
codegen_flags: <defaults>
</compile_context>

<pallas_src>
import functools

import jax
import jax.numpy as jnp
from jax.experimental import pallas as pl
from jax.experimental.pallas import tpu as pltpu


def _ufl_kernel(logits_ref, tgt_ref, focal_ref, inter_ref, *,
                gamma, s_tile, tiles_per_chunk, hw_valid, needs_mask):
    """Per-tile kernel.

    logits_ref: (C, S, 128) f32/bf16 — one pixel tile, all classes
    tgt_ref:    (S, 128)    int      — target class per pixel
    focal_ref:  (8, 128)    f32      — resident accumulator: sum (1-pt)^g * ce
    inter_ref:  (8, 128)    f32      — resident accumulator: sum softmax[target]
    """
    t = pl.program_id(2)

    @pl.when(t == 0)
    def _():
        focal_ref[...] = jnp.zeros_like(focal_ref)
        inter_ref[...] = jnp.zeros_like(inter_ref)

    x = logits_ref[...].astype(jnp.float32)            # (C, S, 128)
    tgt = tgt_ref[...].astype(jnp.int32)               # (S, 128)
    c_dim, s, l = x.shape

    classes = jax.lax.broadcasted_iota(jnp.int32, (c_dim, s, l), 0)
    onehot = (classes == tgt[None, :, :]).astype(jnp.float32)

    # numerically-stable softmax pieces; class axis is the leading axis, so
    # these reductions are elementwise VPU ops across C dense (S,128) slabs.
    m = jnp.max(x, axis=0)                              # (S, 128)
    z = x - m[None, :, :]                               # (C, S, 128)
    ez = jnp.exp(z)                                     # EUP
    se = jnp.sum(ez, axis=0)                            # (S, 128)
    z_t = jnp.sum(onehot * z, axis=0)                   # (S, 128) target logit (shifted)

    ce = jnp.log(se) - z_t                              # cross-entropy per pixel
    pt = jnp.exp(-ce)                                   # softmax prob of target class

    g = float(gamma)
    omp = 1.0 - pt
    if g.is_integer() and g >= 0:
        w = jax.lax.integer_pow(omp, int(g))
    else:
        w = omp ** g

    focal_pix = w * ce                                  # (S, 128)
    inter_pix = pt

    if needs_mask:
        tile_idx = pl.program_id(1) * tiles_per_chunk + t
        row = jax.lax.broadcasted_iota(jnp.int32, (s, l), 0)
        col = jax.lax.broadcasted_iota(jnp.int32, (s, l), 1)
        pix = (tile_idx * s_tile + row) * 128 + col
        valid = pix < hw_valid
        focal_pix = jnp.where(valid, focal_pix, 0.0)
        inter_pix = jnp.where(valid, inter_pix, 0.0)

    # Fold (S,128) -> (8,128) with leading-axis sums (keeps everything on the
    # VPU; the final cross-lane reduction happens once, in the glue).
    focal_ref[...] += jnp.sum(focal_pix.reshape(s // 8, 8, l), axis=0)
    inter_ref[...] += jnp.sum(inter_pix.reshape(s // 8, 8, l), axis=0)


def unified_focal_loss(inputs, targets, *, delta=0.6, gamma=2,
                       internal_weight=None, tile_pixels=65536):
    """inputs: (B, C, H, W) float (f32 or bf16); targets: (B, H, W) int.

    Targets must lie in [0, C) (no ignore/void label), matching the PyTorch
    module's F.cross_entropy / one-hot scatter behavior.
    """
    B, C, H, W = inputs.shape
    HW = H * W

    # Free layout change: channel-major, pixels flattened (reshape only).
    logits = inputs.reshape(B, C, HW)
    tgt = targets.reshape(B, HW)          # keep native narrow int dtype

    # --- tile sizing --------------------------------------------------------
    # Cap the per-tile f32 working set (C * tp * 4 bytes) at ~1 MiB so that
    # double-buffered inputs + in-kernel f32 intermediates fit v5e's 16 MiB
    # scoped VMEM default and stay far below v7x's 64 MiB physical VMEM,
    # while each grid step still moves >= ~0.5-1 MB of HBM traffic.
    budget_bytes = 1 << 20
    tp_max = max(1024, (budget_bytes // (4 * C)) // 1024 * 1024)
    tp = min(int(tile_pixels), tp_max)
    tp = max(1024, (tp // 1024) * 1024)            # multiple of 1024 (S_tile % 8 == 0)
    hw_pad_min = pl.cdiv(HW, 1024) * 1024
    tp = min(tp, hw_pad_min)

    n_tiles = pl.cdiv(HW, tp)
    hw_pad = n_tiles * tp

    # Megacore: when the batch axis alone cannot feed both v7x TensorCores,
    # add a second "parallel" axis over pixel chunks (harmless on 1-TC chips).
    if B == 1 and n_tiles >= 2 and n_tiles % 2 == 0:
        n_chunks = 2
    else:
        n_chunks = 1
    tiles_per_chunk = n_tiles // n_chunks

    needs_mask = hw_pad != HW
    if needs_mask:
        pad = hw_pad - HW
        logits = jnp.pad(logits, ((0, 0), (0, 0), (0, pad)))
        tgt = jnp.pad(tgt, ((0, 0), (0, pad)))

    s_total = hw_pad // 128
    s_tile = tp // 128
    logits = logits.reshape(B, C, s_total, 128)
    tgt = tgt.reshape(B, s_total, 128)

    kernel = functools.partial(
        _ufl_kernel, gamma=gamma, s_tile=s_tile,
        tiles_per_chunk=tiles_per_chunk, hw_valid=HW, needs_mask=needs_mask)

    focal_out, inter_out = pl.pallas_call(
        kernel,
        out_shape=(jax.ShapeDtypeStruct((B, n_chunks, 8, 128), jnp.float32),
                   jax.ShapeDtypeStruct((B, n_chunks, 8, 128), jnp.float32)),
        grid_spec=pltpu.PrefetchScalarGridSpec(
            num_scalar_prefetch=0,
            grid=(B, n_chunks, tiles_per_chunk),
            in_specs=[
                pl.BlockSpec((None, C, s_tile, 128),
                             lambda b, c, t: (b, 0, c * tiles_per_chunk + t, 0)),
                pl.BlockSpec((None, s_tile, 128),
                             lambda b, c, t: (b, c * tiles_per_chunk + t, 0)),
            ],
            out_specs=[
                pl.BlockSpec((None, None, 8, 128), lambda b, c, t: (b, c, 0, 0)),
                pl.BlockSpec((None, None, 8, 128), lambda b, c, t: (b, c, 0, 0)),
            ],
        ),
        compiler_params=pltpu.CompilerParams(
            dimension_semantics=("parallel", "parallel", "arbitrary")),
    )(logits, tgt)

    # ---- tiny scalar finalization (matches the PyTorch reductions) ---------
    eps = 1e-06
    focal = jnp.sum(focal_out) / (B * HW)              # mean over all pixels
    inter = jnp.sum(inter_out, axis=(1, 2, 3))         # (B,) intersection
    # softmax rows and one-hot rows each sum to 1 per valid pixel (no
    # ignore_index), so FP = FN = H*W - intersection for every batch element.
    hw_f = jnp.float32(HW)
    fps = hw_f - inter
    fns = hw_f - inter
    denom = inter + delta * fps + (1.0 - delta) * fns
    tversky_idx = (inter + eps) / (denom + eps)
    tversky = jnp.mean((1.0 - tversky_idx) ** gamma)

    if internal_weight is not None:
        return internal_weight * tversky + (1.0 - internal_weight) * focal
    return tversky + focal
    # TODO(synk): the optional per-class `weight` argument of FocalLossV2 is
    # not implemented (the reference module is instantiated with weight=None).


def _reference(inputs, targets, *, delta=0.6, gamma=2):
    """Pure-JAX reference mirroring the PyTorch module (for verification)."""
    B, C, H, W = inputs.shape
    logp = jax.nn.log_softmax(inputs.astype(jnp.float32), axis=1)
    onehot = jax.nn.one_hot(targets, C, axis=1, dtype=jnp.float32)
    ce = -jnp.sum(onehot * logp, axis=1)                        # (B, H, W)
    pt = jnp.exp(-ce)
    focal = jnp.mean(((1.0 - pt) ** gamma) * ce)

    p = jax.nn.softmax(inputs.astype(jnp.float32), axis=1)
    dims = (1, 2, 3)
    inter = jnp.sum(p * onehot, dims)
    fps = jnp.sum(p * (1.0 - onehot), dims)
    fns = jnp.sum((1.0 - p) * onehot, dims)
    eps = 1e-06
    tv = (inter + eps) / (inter + delta * fps + (1.0 - delta) * fns + eps)
    tversky = jnp.mean((1.0 - tv) ** gamma)
    return tversky + focal


if __name__ == "__main__":
    key = jax.random.PRNGKey(0)
    k1, k2 = jax.random.split(key)

    B, C, H, W = 2, 4, 16, 16
    inputs = jax.random.normal(k1, (B, C, H, W), dtype=jnp.float32)
    targets = jax.random.randint(k2, (B, H, W), 0, C, dtype=jnp.int32)

    loss = unified_focal_loss(inputs, targets, delta=0.6, gamma=2)
    loss = jax.block_until_ready(loss)

    ref = jax.block_until_ready(_reference(inputs, targets, delta=0.6, gamma=2))
    assert jnp.allclose(loss, ref, rtol=1e-4, atol=1e-5), (loss, ref)

    print("KERNEL_OK")
</pallas_src>

<mosaic_0001>
module attributes {stable_mosaic.version = 11 : i64} {
  func.func @_ufl_kernel(%arg0: i32, %arg1: i32, %arg2: i32, %arg3: memref<1x4x8x128xf32, #tpu.memory_space<vmem>>, %arg4: memref<1x8x128xi32, #tpu.memory_space<vmem>>, %arg5: memref<1x1x8x128xf32, #tpu.memory_space<vmem>>, %arg6: memref<1x1x8x128xf32, #tpu.memory_space<vmem>>) attributes {dimension_semantics = [#tpu.dimension_semantics<parallel>, #tpu.dimension_semantics<parallel>, #tpu.dimension_semantics<arbitrary>], iteration_bounds = array<i64: 2, 1, 1>, scalar_prefetch = 0 : i64, scratch_operands = 0 : i64, tpu.core_type = #tpu.core_type<tc>, window_params = [{transform_indices = @transform_0, window_bounds = array<i64: 1, 4, 8, 128>}, {transform_indices = @transform_1, window_bounds = array<i64: 1, 8, 128>}, {transform_indices = @transform_2, window_bounds = array<i64: 1, 1, 8, 128>}, {transform_indices = @transform_3, window_bounds = array<i64: 1, 1, 8, 128>}]} {
    %c0_i32 = arith.constant 0 : i32
    %0 = arith.cmpi eq, %arg2, %c0_i32 : i32
    %1 = arith.extui %0 : i1 to i32
    %c0_i32_0 = arith.constant 0 : i32
    %2 = arith.cmpi ne, %1, %c0_i32_0 : i32
    scf.if %2 {
      %cst_31 = arith.constant 0.000000e+00 : f32
      %62 = vector.broadcast %cst_31 : f32 to vector<8x128xf32>
      %c0_32 = arith.constant 0 : index
      %c0_33 = arith.constant 0 : index
      %c0_34 = arith.constant 0 : index
      %c0_35 = arith.constant 0 : index
      %63 = vector.load %arg5[%c0_32, %c0_33, %c0_34, %c0_35] : memref<1x1x8x128xf32, #tpu.memory_space<vmem>>, vector<1x1x8x128xf32>
      %64 = vector.shape_cast %63 : vector<1x1x8x128xf32> to vector<8x128xf32>
      %65 = vector.shape_cast %62 : vector<8x128xf32> to vector<1x1x8x128xf32>
      tpu.vector_store %arg5[%c0_32, %c0_33, %c0_34, %c0_35], %65 {strides = array<i32>} : memref<1x1x8x128xf32, #tpu.memory_space<vmem>>, vector<1x1x8x128xf32>,
      %cst_36 = arith.constant 0.000000e+00 : f32
      %66 = vector.broadcast %cst_36 : f32 to vector<8x128xf32>
      %c0_37 = arith.constant 0 : index
      %c0_38 = arith.constant 0 : index
      %c0_39 = arith.constant 0 : index
      %c0_40 = arith.constant 0 : index
      %67 = vector.load %arg6[%c0_37, %c0_38, %c0_39, %c0_40] : memref<1x1x8x128xf32, #tpu.memory_space<vmem>>, vector<1x1x8x128xf32>
      %68 = vector.shape_cast %67 : vector<1x1x8x128xf32> to vector<8x128xf32>
      %69 = vector.shape_cast %66 : vector<8x128xf32> to vector<1x1x8x128xf32>
      tpu.vector_store %arg6[%c0_37, %c0_38, %c0_39, %c0_40], %69 {strides = array<i32>} : memref<1x1x8x128xf32, #tpu.memory_space<vmem>>, vector<1x1x8x128xf32>,
    } else {
    }
    %c0 = arith.constant 0 : index
    %c0_1 = arith.constant 0 : index
    %c0_2 = arith.constant 0 : index
    %c0_3 = arith.constant 0 : index
    %3 = vector.load %arg3[%c0, %c0_1, %c0_2, %c0_3] : memref<1x4x8x128xf32, #tpu.memory_space<vmem>>, vector<1x4x8x128xf32>
    %4 = vector.shape_cast %3 : vector<1x4x8x128xf32> to vector<4x8x128xf32>
    %c0_4 = arith.constant 0 : index
    %c0_5 = arith.constant 0 : index
    %c0_6 = arith.constant 0 : index
    %5 = vector.load %arg4[%c0_4, %c0_5, %c0_6] : memref<1x8x128xi32, #tpu.memory_space<vmem>>, vector<1x8x128xi32>
    %6 = vector.shape_cast %5 : vector<1x8x128xi32> to vector<8x128xi32>
    %7 = tpu.iota {dimensions = array<i32: 0>} : vector<4x8x128xi32>
    %8 = vector.shape_cast %6 : vector<8x128xi32> to vector<1x8x128xi32>
    %9 = vector.broadcast %8 : vector<1x8x128xi32> to vector<4x8x128xi32>
    %10 = arith.cmpi eq, %7, %9 : vector<4x8x128xi32>
    %11 = arith.extui %10 : vector<4x8x128xi1> to vector<4x8x128xi32>
    %12 = arith.sitofp %11 : vector<4x8x128xi32> to vector<4x8x128xf32>
    %cst = arith.constant dense<0xFF800000> : vector<8x128xf32>
    %13 = vector.multi_reduction <maximumf>, %4, %cst [0] : vector<4x8x128xf32> to vector<8x128xf32>
    %14 = vector.shape_cast %13 : vector<8x128xf32> to vector<1x8x128xf32>
    %15 = vector.broadcast %14 : vector<1x8x128xf32> to vector<4x8x128xf32>
    %16 = arith.subf %4, %15 : vector<4x8x128xf32>
    %17 = math.exp %16 : vector<4x8x128xf32>
    %cst_7 = arith.constant dense<0.000000e+00> : vector<8x128xf32>
    %18 = vector.multi_reduction <add>, %17, %cst_7 [0] : vector<4x8x128xf32> to vector<8x128xf32>
    %19 = arith.mulf %12, %16 : vector<4x8x128xf32>
    %cst_8 = arith.constant dense<0.000000e+00> : vector<8x128xf32>
    %20 = vector.multi_reduction <add>, %19, %cst_8 [0] : vector<4x8x128xf32> to vector<8x128xf32>
    %21 = math.log %18 : vector<8x128xf32>
    %22 = arith.subf %21, %20 : vector<8x128xf32>
    %cst_9 = arith.constant 0.000000e+00 : f32
    %23 = vector.broadcast %cst_9 : f32 to vector<8x128xf32>
    %24 = arith.subf %23, %22 : vector<8x128xf32>
    %25 = math.exp %24 : vector<8x128xf32>
    %cst_10 = arith.constant 1.000000e+00 : f32
    %26 = vector.broadcast %cst_10 : f32 to vector<8x128xf32>
    %27 = arith.subf %26, %25 : vector<8x128xf32>
    %28 = arith.mulf %27, %27 : vector<8x128xf32>
    %29 = arith.mulf %28, %22 : vector<8x128xf32>
    %c1_i32 = arith.constant 1 : i32
    %30 = arith.muli %arg1, %c1_i32 : i32
    %31 = arith.addi %30, %arg2 : i32
    %32 = tpu.iota {dimensions = array<i32: 0>} : vector<8x128xi32>
    %33 = tpu.iota {dimensions = array<i32: 1>} : vector<8x128xi32>
    %c8_i32 = arith.constant 8 : i32
    %34 = arith.muli %31, %c8_i32 : i32
    %35 = vector.broadcast %34 : i32 to vector<8x128xi32>
    %36 = arith.addi %35, %32 : vector<8x128xi32>
    %c128_i32 = arith.constant 128 : i32
    %37 = vector.broadcast %c128_i32 : i32 to vector<8x128xi32>
    %38 = arith.muli %36, %37 : vector<8x128xi32>
    %39 = arith.addi %38, %33 : vector<8x128xi32>
    %c256_i32 = arith.constant 256 : i32
    %40 = vector.broadcast %c256_i32 : i32 to vector<8x128xi32>
    %41 = arith.cmpi slt, %39, %40 : vector<8x128xi32>
    %cst_11 = arith.constant 0.000000e+00 : f32
    %42 = vector.broadcast %cst_11 : f32 to vector<8x128xf32>
    %43 = arith.select %41, %29, %42 : vector<8x128xi1>, vector<8x128xf32>
    %cst_12 = arith.constant 0.000000e+00 : f32
    %44 = vector.broadcast %cst_12 : f32 to vector<8x128xf32>
    %45 = arith.select %41, %25, %44 : vector<8x128xi1>, vector<8x128xf32>
    %c0_13 = arith.constant 0 : index
    %c0_14 = arith.constant 0 : index
    %c0_15 = arith.constant 0 : index
    %c0_16 = arith.constant 0 : index
    %46 = vector.load %arg5[%c0_13, %c0_14, %c0_15, %c0_16] : memref<1x1x8x128xf32, #tpu.memory_space<vmem>>, vector<1x1x8x128xf32>
    %47 = vector.shape_cast %46 : vector<1x1x8x128xf32> to vector<8x128xf32>
    %48 = vector.shape_cast %43 : vector<8x128xf32> to vector<1x8x128xf32>
    %cst_17 = arith.constant dense<0.000000e+00> : vector<8x128xf32>
    %49 = vector.multi_reduction <add>, %48, %cst_17 [0] : vector<1x8x128xf32> to vector<8x128xf32>
    %50 = arith.addf %47, %49 : vector<8x128xf32>
    %c0_18 = arith.constant 0 : index
    %c0_19 = arith.constant 0 : index
    %c0_20 = arith.constant 0 : index
    %c0_21 = arith.constant 0 : index
    %51 = vector.load %arg5[%c0_18, %c0_19, %c0_20, %c0_21] : memref<1x1x8x128xf32, #tpu.memory_space<vmem>>, vector<1x1x8x128xf32>
    %52 = vector.shape_cast %51 : vector<1x1x8x128xf32> to vector<8x128xf32>
    %53 = vector.shape_cast %50 : vector<8x128xf32> to vector<1x1x8x128xf32>
    tpu.vector_store %arg5[%c0_18, %c0_19, %c0_20, %c0_21], %53 {strides = array<i32>} : memref<1x1x8x128xf32, #tpu.memory_space<vmem>>, vector<1x1x8x128xf32>,
    %c0_22 = arith.constant 0 : index
    %c0_23 = arith.constant 0 : index
    %c0_24 = arith.constant 0 : index
    %c0_25 = arith.constant 0 : index
    %54 = vector.load %arg6[%c0_22, %c0_23, %c0_24, %c0_25] : memref<1x1x8x128xf32, #tpu.memory_space<vmem>>, vector<1x1x8x128xf32>
    %55 = vector.shape_cast %54 : vector<1x1x8x128xf32> to vector<8x128xf32>
    %56 = vector.shape_cast %45 : vector<8x128xf32> to vector<1x8x128xf32>
    %cst_26 = arith.constant dense<0.000000e+00> : vector<8x128xf32>
    %57 = vector.multi_reduction <add>, %56, %cst_26 [0] : vector<1x8x128xf32> to vector<8x128xf32>
    %58 = arith.addf %55, %57 : vector<8x128xf32>
    %c0_27 = arith.constant 0 : index
    %c0_28 = arith.constant 0 : index
    %c0_29 = arith.constant 0 : index
    %c0_30 = arith.constant 0 : index
    %59 = vector.load %arg6[%c0_27, %c0_28, %c0_29, %c0_30] : memref<1x1x8x128xf32, #tpu.memory_space<vmem>>, vector<1x1x8x128xf32>
    %60 = vector.shape_cast %59 : vector<1x1x8x128xf32> to vector<8x128xf32>
    %61 = vector.shape_cast %58 : vector<8x128xf32> to vector<1x1x8x128xf32>
    tpu.vector_store %arg6[%c0_27, %c0_28, %c0_29, %c0_30], %61 {strides = array<i32>} : memref<1x1x8x128xf32, #tpu.memory_space<vmem>>, vector<1x1x8x128xf32>,
    return
  }
  func.func @transform_0(%arg0: i32, %arg1: i32, %arg2: i32) -> (i32, i32, i32, i32) {
    %c1_i32 = arith.constant 1 : i32
    %0 = arith.muli %arg1, %c1_i32 : i32
    %1 = arith.addi %0, %arg2 : i32
    %c0_i32 = arith.constant 0 : i32
    %c0_i32_0 = arith.constant 0 : i32
    %c0_i32_1 = arith.constant 0 : i32
    return %arg0, %c0_i32, %1, %c0_i32_0 : i32, i32, i32, i32
  }
  func.func @transform_1(%arg0: i32, %arg1: i32, %arg2: i32) -> (i32, i32, i32) {
    %c1_i32 = arith.constant 1 : i32
    %0 = arith.muli %arg1, %c1_i32 : i32
    %1 = arith.addi %0, %arg2 : i32
    %c0_i32 = arith.constant 0 : i32
    %c0_i32_0 = arith.constant 0 : i32
    return %arg0, %1, %c0_i32 : i32, i32, i32
  }
  func.func @transform_2(%arg0: i32, %arg1: i32, %arg2: i32) -> (i32, i32, i32, i32) {
    %c0_i32 = arith.constant 0 : i32
    %c0_i32_0 = arith.constant 0 : i32
    %c0_i32_1 = arith.constant 0 : i32
    return %arg0, %arg1, %c0_i32, %c0_i32_0 : i32, i32, i32, i32
  }
  func.func @transform_3(%arg0: i32, %arg1: i32, %arg2: i32) -> (i32, i32, i32, i32) {
    %c0_i32 = arith.constant 0 : i32
    %c0_i32_0 = arith.constant 0 : i32
    %c0_i32_1 = arith.constant 0 : i32
    return %arg0, %arg1, %c0_i32, %c0_i32_0 : i32, i32, i32, i32
  }
}

</mosaic_0001>

<llo_original>
// kernel: tpu_custom_call.1
$region0: #{tpu_custom_call.1}
  #allocation0 [shape = 'u32[]', space=smem, size = 0x4, offset = 0x4, fixed_abs, tag = 'smem constant byte address 0x4 - core index']
  #allocation1 [shape = 'u32[144,128]{1,0:T(1,128)}', space=vmem, size = 0x12000, scoped, tag = 'internal scratch']
  %s0 = inlined_call_operand.hbm [shape: f32[2,4,8,128], index: 0, kind: input, shape index: {}]
  %s1 = inlined_call_operand.hbm [shape: s32[2,8,128], index: 1, kind: input, shape index: {}]
  %s2 = inlined_call_operand.hbm [shape: f32[2,1,8,128], index: 2, kind: output, shape index: {0}]
  %s3 = inlined_call_operand.hbm [shape: f32[2,1,8,128], index: 3, kind: output, shape index: {1}]
  %4 = xla_tuple %s2, %s3
  %s5 = sld [smem:[#allocation0]]
  $region61: #{tpu_custom_call.1} parent=0
    _
  %s7 = ssub.s32 1, %s5
  %s8 = scalar_select 0, %s7, %s5
  $region1: #{tpu_custom_call.1} parent=0
    #allocation2 [shape = 'u8[32768]{0}', space=vmem, size = 0x8000, scoped, tag = 'input window, operand 0']
    #allocation3 [shape = 's32[2]{0}', space=sflag, size = 0x8, scoped, tag = 'scoped memory for tpu_custom_call.1']
    #allocation4 [shape = 's32[2]{0}', space=sflag, size = 0x8, scoped, tag = 'scoped memory for tpu_custom_call.1']
    #allocation5 [shape = 'u8[8192]{0}', space=vmem, size = 0x2000, scoped, tag = 'input window, operand 1']
    #allocation6 [shape = 's32[2]{0}', space=sflag, size = 0x8, scoped, tag = 'scoped memory for tpu_custom_call.1']
    #allocation7 [shape = 'u8[8192]{0}', space=vmem, size = 0x2000, scoped, tag = 'output window, operand 0']
    #allocation8 [shape = 'u8[8192]{0}', space=vmem, size = 0x2000, scoped, tag = 'output window, operand 1']
    #allocation9 [shape = 's32[2]{0}', space=sflag, size = 0x8, scoped, tag = 'scoped memory for tpu_custom_call.1']
    %9 = vsyncpa [#allocation3], 0
    %s10 = scalar_lea.sflag [#allocation3], 1
    %11 = vsyncpa %s10, 0
    %12 = vsyncpa [#allocation6], 0
    %s13 = scalar_lea.sflag [#allocation6], 1
    %14 = vsyncpa %s13, 0
    %15 = vsyncpa [#allocation4], 0
    %s16 = scalar_lea.sflag [#allocation4], 1
    %17 = vsyncpa %s16, 0
    %18 = vsyncpa [#allocation9], 0
    %s19 = scalar_lea.sflag [#allocation9], 1
    %20 = vsyncpa %s19, 0
    loop: start=0, step=1, limit=4
    $region2: #{tpu_custom_call.1} parent=1 // loop_pre_header
      _
    $region3: #{tpu_custom_call.1} parent=1 // loop_header
      %s22 = sphi 0, %s26
      %p23 = scmp.ge.s32.totalorder %s22, 4
      %s29 = sphi 0, %s48
      %s30 = sphi 0, %s44
      %s31 = sphi 0, %s40
      %s32 = sphi 0, %s29
      %s33 = sphi 0, %s30
      %s34 = sphi 0, %s31
      %s35 = sphi 0, %s32
      %s36 = sphi 0, %s33
      %s37 = sphi 0, %s34
      %s55 = sphi 0, %s57
      %s58 = sphi 0, %s55
      %s59 = sphi 0, %s58
      %s75 = sphi 0, %s59
      %s85 = sphi 0, %s87
      %s88 = sphi 0, %s85
      %s89 = sphi 0, %s88
      %s105 = sphi 0, %s89
      %s113 = sphi 0, %s115
      %s116 = sphi 0, %s113
      %s117 = sphi 0, %s116
      %s133 = sphi 0, %s117
      %s141 = sphi 0, %s143
      %s144 = sphi 0, %s141
      %s145 = sphi 0, %s144
      %s161 = sphi 0, %s145
    $region4: #{tpu_custom_call.1} parent=1 // loop_header_branch
      %25 = sbr.rel (%p23) target = $region8
    $region5: #{tpu_custom_call.1} parent=1 // loop_body
      %s27 = ssub.s32 %s22, 1
      %s28 = ssub.s32 %s22, 2
      %s38 = sadd.s32 1, %s31
      %p39 = scmp.ge.s32.totalorder %s38, 1
      %s40 = scalar_select %p39, 0, %s38
      %s41 = sadd.s32 1, %s30
      %s42 = scalar_select %p39, %s41, %s30
      %p43 = scmp.ge.s32.totalorder %s42, 1
      %s44 = scalar_select %p43, 0, %s42
      %s45 = sadd.s32 1, %s29
      %s46 = scalar_select %p43, %s45, %s29
      %p47 = scmp.ge.s32.totalorder %s46, 2
      %s48 = scalar_select %p47, 0, %s46
      %s49 = sadd.s32 %s30, %s31
      %s50 = sadd.s32 %s44, %s40
      %s51 = ssub.s32 %s29, %s48
      %s52 = ssub.s32 %s49, %s50
      %s53 = sor.u32 %s51, %s52
      %p54 = scmp.eq.s32.totalorder %s53, 0
      %s56 = sadd.s32 %s55, 1
      %s57 = scalar_select %p54, %s55, %s56
      %p60 = pneg %p54
      %p61 = scmp.eq.s32.totalorder %s22, 1
      %p62 = por %p60, %p61
      %p63 = scmp.ne.s32.totalorder %s55, %s58
      %p64 = scmp.eq.s32.totalorder %s22, 0
      %p65 = por %p63, %p64
      %p66 = scmp.ne.s32.totalorder %s55, %s58
      %p67 = scmp.eq.s32.totalorder %s27, 1
      %p68 = por %p66, %p67
      %p69 = scmp.ne.s32.totalorder %s58, %s59
      %p70 = scmp.eq.s32.totalorder %s27, 0
      %p71 = por %p69, %p70
      %p72 = scmp.ne.s32.totalorder %s58, %s59
      %p73 = scmp.eq.s32.totalorder %s28, 1
      %p74 = por %p72, %p73
      %p76 = scmp.ne.s32.totalorder %s59, %s75
      %p77 = scmp.eq.s32.totalorder %s28, 0
      %p78 = por %p76, %p77
      %s79 = sadd.s32 %s30, %s31
      %s80 = sadd.s32 %s44, %s40
      %s81 = ssub.s32 %s29, %s48
      %s82 = ssub.s32 %s79, %s80
      %s83 = sor.u32 %s81, %s82
      %p84 = scmp.eq.s32.totalorder %s83, 0
      %s86 = sadd.s32 %s85, 1
      %s87 = scalar_select %p84, %s85, %s86
      %p90 = pneg %p84
      %p91 = scmp.eq.s32.totalorder %s22, 1
      %p92 = por %p90, %p91
      %p93 = scmp.ne.s32.totalorder %s85, %s88
      %p94 = scmp.eq.s32.totalorder %s22, 0
      %p95 = por %p93, %p94
      %p96 = scmp.ne.s32.totalorder %s85, %s88
      %p97 = scmp.eq.s32.totalorder %s27, 1
      %p98 = por %p96, %p97
      %p99 = scmp.ne.s32.totalorder %s88, %s89
      %p100 = scmp.eq.s32.totalorder %s27, 0
      %p101 = por %p99, %p100
      %p102 = scmp.ne.s32.totalorder %s88, %s89
      %p103 = scmp.eq.s32.totalorder %s28, 1
      %p104 = por %p102, %p103
      %p106 = scmp.ne.s32.totalorder %s89, %s105
      %p107 = scmp.eq.s32.totalorder %s28, 0
      %p108 = por %p106, %p107
      %s109 = ssub.s32 %s29, %s48
      %s110 = ssub.s32 %s30, %s44
      %s111 = sor.u32 %s109, %s110
      %p112 = scmp.eq.s32.totalorder %s111, 0
      %s114 = sadd.s32 %s113, 1
      %s115 = scalar_select %p112, %s113, %s114
      %p118 = pneg %p112
      %p119 = scmp.eq.s32.totalorder %s22, 1
      %p120 = por %p118, %p119
      %p121 = scmp.ne.s32.totalorder %s113, %s116
      %p122 = scmp.eq.s32.totalorder %s22, 0
      %p123 = por %p121, %p122
      %p124 = scmp.ne.s32.totalorder %s113, %s116
      %p125 = scmp.eq.s32.totalorder %s27, 1
      %p126 = por %p124, %p125
      %p127 = scmp.ne.s32.totalorder %s116, %s117
      %p128 = scmp.eq.s32.totalorder %s27, 0
      %p129 = por %p127, %p128
      %p130 = scmp.ne.s32.totalorder %s116, %s117
      %p131 = scmp.eq.s32.totalorder %s28, 1
      %p132 = por %p130, %p131
      %p134 = scmp.ne.s32.totalorder %s117, %s133
      %p135 = scmp.eq.s32.totalorder %s28, 0
      %p136 = por %p134, %p135
      %s137 = ssub.s32 %s29, %s48
      %s138 = ssub.s32 %s30, %s44
      %s139 = sor.u32 %s137, %s138
      %p140 = scmp.eq.s32.totalorder %s139, 0
      %s142 = sadd.s32 %s141, 1
      %s143 = scalar_select %p140, %s141, %s142
      %p146 = pneg %p140
      %p147 = scmp.eq.s32.totalorder %s22, 1
      %p148 = por %p146, %p147
      %p149 = scmp.ne.s32.totalorder %s141, %s144
      %p150 = scmp.eq.s32.totalorder %s22, 0
      %p151 = por %p149, %p150
      %p152 = scmp.ne.s32.totalorder %s141, %s144
      %p153 = scmp.eq.s32.totalorder %s27, 1
      %p154 = por %p152, %p153
      %p155 = scmp.ne.s32.totalorder %s144, %s145
      %p156 = scmp.eq.s32.totalorder %s27, 0
      %p157 = por %p155, %p156
      %p158 = scmp.ne.s32.totalorder %s144, %s145
      %p159 = scmp.eq.s32.totalorder %s28, 1
      %p160 = por %p158, %p159
      %p162 = scmp.ne.s32.totalorder %s145, %s161
      %p163 = scmp.eq.s32.totalorder %s28, 0
      %p164 = por %p162, %p163
      %p165 = scmp.le.s32.totalorder 1, %s22
      %p166 = scmp.lt.s32.totalorder %s22, 3
      %p167 = pnand %p165, %p166
      %p168 = pneg %p167
      // Predicated region
      $region9: #{tpu_custom_call.1} parent=5 // pred_check
        _
      $region10: #{tpu_custom_call.1} parent=5 // pred_check_branch
        %170 = sbr.rel (%p167) target = $region12
      $region11: #{tpu_custom_call.1} parent=5 // pred_region
        %s171 = ssub.s32 %s22, 1
      $region12: #{tpu_custom_call.1} parent=5 // pred_fallthru
        _
      %p172 = scmp.lt.s32.totalorder %s22, 2
      // Predicated region
      $region13: #{tpu_custom_call.1} parent=5 // pred_check
        %p173 = pneg %p172
      $region14: #{tpu_custom_call.1} parent=5 // pred_check_branch
        %175 = sbr.rel (%p173) target = $region16
      $region15: #{tpu_custom_call.1} parent=5 // pred_region
        // Predicated region
        $region17: #{tpu_custom_call.1} parent=15 // pred_check
          %p176 = pneg %p65
        $region18: #{tpu_custom_call.1} parent=15 // pred_check_branch
          %178 = sbr.rel (%p176) target = $region20
        $region19: #{tpu_custom_call.1} parent=15 // pred_region
          %s179 = sand.u32 %s55, 1
          %s180 = scalar_lea.sflag [#allocation3], %s179
          %s181 = sand.u32 %s55, 1
          %s182 = smul.addr %s181, 32
          %s183 = scalar_lea.vmem [#allocation2], %s182
          %s184 = sadd.s32 %s30, %s31
          %s186 = ssub.s32 512, 512
          %187 = vsyncadd %s180, %s186
          %s188 = smul.addr %s29, 4
          %s189 = sadd.s32 %s184, %s188
          %s190 = smul.addr %s189, 128
          %s191 = scalar_lea.hbm %s0, %s190
          %s192 = sshll.u32 %s183, 4
          %s193 = int_to_ptr.vmem [resolvable:$true] %s192
          %198 = dma.hbm_to_vmem [thread:$0]  %s191, 512, %s193, %s180, 128, 128, 8
        $region20: #{tpu_custom_call.1} parent=15 // pred_fallthru
          _
        // Predicated region
        $region21: #{tpu_custom_call.1} parent=15 // pred_check
          %p199 = pneg %p95
        $region22: #{tpu_custom_call.1} parent=15 // pred_check_branch
          %201 = sbr.rel (%p199) target = $region24
        $region23: #{tpu_custom_call.1} parent=15 // pred_region
          %s202 = sand.u32 %s85, 1
          %s203 = scalar_lea.sflag [#allocation6], %s202
          %s204 = sand.u32 %s85, 1
          %s205 = smul.addr %s204, 8
          %s206 = scalar_lea.vmem [#allocation5], %s205
          %s207 = sadd.s32 %s30, %s31
          %s209 = ssub.s32 128, 128
          %210 = vsyncadd %s203, %s209
          %s211 = sadd.s32 %s207, %s29
          %s212 = smul.addr %s211, 128
          %s213 = scalar_lea.hbm %s1, %s212
          %s215 = sshll.u32 %s206, 4
          %s216 = int_to_ptr.vmem [resolvable:$true] %s215
          %218 = dma.hbm_to_vmem [thread:$0]  %s213, 128, %s216, %s203
        $region24: #{tpu_custom_call.1} parent=15 // pred_fallthru
          _
      $region16: #{tpu_custom_call.1} parent=5 // pred_fallthru
        _
      %p219 = scmp.le.s32.totalorder 1, %s22
      %p220 = scmp.lt.s32.totalorder %s22, 3
      %p221 = pnand %p219, %p220
      %p222 = pneg %p221
      // Predicated region
      $region25: #{tpu_custom_call.1} parent=5 // pred_check
        _
      $region26: #{tpu_custom_call.1} parent=5 // pred_check_branch
        %224 = sbr.rel (%p221) target = $region28
      $region27: #{tpu_custom_call.1} parent=5 // pred_region
        %s225 = ssub.s32 %s22, 1
        %s226 = sand.u32 %s58, 1
        %s227 = scalar_lea.sflag [#allocation3], %s226
        %s228 = sand.u32 %s58, 1
        %s229 = smul.addr %s228, 32
        %s230 = scalar_lea.vmem [#allocation2], %s229
        // Predicated region
        $region29: #{tpu_custom_call.1} parent=27 // pred_check
          %p231 = pneg %p71
        $region30: #{tpu_custom_call.1} parent=27 // pred_check_branch
          %233 = sbr.rel (%p231) target = $region32
        $region31: #{tpu_custom_call.1} parent=27 // pred_region
          %234 = dma.done %s227, 512
        $region32: #{tpu_custom_call.1} parent=27 // pred_fallthru
          _
        %s235 = sand.u32 %s88, 1
        %s236 = scalar_lea.sflag [#allocation6], %s235
        %s237 = sand.u32 %s88, 1
        %s238 = smul.addr %s237, 8
        %s239 = scalar_lea.vmem [#allocation5], %s238
        // Predicated region
        $region33: #{tpu_custom_call.1} parent=27 // pred_check
          %p240 = pneg %p101
        $region34: #{tpu_custom_call.1} parent=27 // pred_check_branch
          %242 = sbr.rel (%p240) target = $region36
        $region35: #{tpu_custom_call.1} parent=27 // pred_region
          %243 = dma.done %s236, 128
        $region36: #{tpu_custom_call.1} parent=27 // pred_fallthru
          _
        %s244 = sand.u32 %s58, 1
        %s245 = scalar_lea.sflag [#allocation3], %s244
        %s246 = sand.u32 %s58, 1
        %s247 = smul.addr %s246, 32
        %s248 = scalar_lea.vmem [#allocation2], %s247
        %p249 = pneg %p71
        %p250 = pneg %p68
        %s251 = sand.u32 %s88, 1
        %s252 = scalar_lea.sflag [#allocation6], %s251
        %s253 = sand.u32 %s88, 1
        %s254 = smul.addr %s253, 8
        %s255 = scalar_lea.vmem [#allocation5], %s254
        %p256 = pneg %p101
        %p257 = pneg %p98
        %p258 = pneg %p129
        %p259 = pneg %p126
        %s260 = sand.u32 %s116, 1
        %s261 = scalar_lea.sflag [#allocation4], %s260
        %s262 = sand.u32 %s116, 1
        %s263 = smul.addr %s262, 8
        %s264 = scalar_lea.vmem [#allocation7], %s263
        %p265 = pneg %p157
        %p266 = pneg %p154
        %s267 = sand.u32 %s144, 1
        %s268 = scalar_lea.sflag [#allocation9], %s267
        %s269 = sand.u32 %s144, 1
        %s270 = smul.addr %s269, 8
        %s271 = scalar_lea.vmem [#allocation8], %s270
        %s272 = sadd.s32 %s33, %s34
        %s273 = sadd.s32 %s33, %s34
        %p274 = scmp.eq.s32.totalorder %s34, 0
        // Predicated region
        $region37: #{tpu_custom_call.1} parent=27 // pred_check
          %p275 = pneg %p274
        $region38: #{tpu_custom_call.1} parent=27 // pred_check_branch
          %277 = sbr.rel (%p275) target = $region40
        $region39: #{tpu_custom_call.1} parent=27 // pred_region
          %278 = vst [vmem:[%s264] sm:$0xff] 0.0
          %279 = vst [vmem:[%s271] sm:$0xff] 0.0
        $region40: #{tpu_custom_call.1} parent=27 // pred_fallthru
          _
        %v280 = vld [vmem:[%s230] sm:$0xff]
        %v281 = vld [vmem:[%s230 + $0x8] sm:$0xff]
        %v282 = vld [vmem:[%s230 + $0x10] sm:$0xff]
        %v283 = vld [vmem:[%s230 + $0x18] sm:$0xff]
        %v284 = vld [vmem:[%s239] sm:$0xff]
        %vm285 = vcmp.eq.s32.totalorder %v284, 0
        %vm286 = vcmp.eq.s32.totalorder %v284, 1
        %vm287 = vcmp.eq.s32.totalorder %v284, 2
        %vm288 = vcmp.eq.s32.totalorder %v284, 3
        %v289 = vsel %vm285, 1, 0
        %v290 = vsel %vm286, 1, 0
        %v291 = vsel %vm287, 1, 0
        %v292 = vsel %vm288, 1, 0
        %v293 = vcvt.s32.f32 %v289
        %v294 = vcvt.s32.f32 %v290
        %v295 = vcvt.s32.f32 %v291
        %v296 = vcvt.s32.f32 %v292
        %v297 = vmax.f32 %v280, %v281
        %v298 = vmax.f32 %v282, %v283
        %v299 = vmax.f32 %v297, %v298
        %v300 = vsub.f32 %v280, %v299
        %v301 = vsub.f32 %v281, %v299
        %v302 = vsub.f32 %v282, %v299
        %v303 = vsub.f32 %v283, %v299
        %v304 = vmul.f32 %v300, 1.442695
        %v305 = vpow.pop %v304
        %v306 = vmul.f32 %v301, 1.442695
        %v307 = vpow.pop %v306
        %v308 = vmul.f32 %v302, 1.442695
        %v309 = vpow.pop %v308
        %v310 = vmul.f32 %v303, 1.442695
        %v311 = vpow.pop %v310
        %v312 = vadd.f32 %v305, %v307
        %v313 = vadd.f32 %v312, %v309
        %v314 = vadd.f32 %v313, %v311
        %v315 = vmul.f32 %v293, %v300
        %v316 = vmul.f32 %v294, %v301
        %v317 = vmul.f32 %v295, %v302
        %v318 = vmul.f32 %v296, %v303
        %v319 = vadd.f32 %v315, %v316
        %v320 = vadd.f32 %v319, %v317
        %v321 = vadd.f32 %v320, %v318
        %v322 = vlog2.pop %v314
        %v323 = vmul.f32 %v322, 0.6931472
        %v324 = vsub.f32 %v323, %v321
        %v325 = vsub.f32 0.0, %v324
        %v326 = vmul.f32 %v325, 1.442695
        %v327 = vpow.pop %v326
        %v328 = vsub.f32 1.0, %v327
        %v329 = vmul.f32 %v328, %v328
        %v330 = vmul.f32 %v329, %v324
        %s331 = sadd.s32 %s33, %s34
        %v332 = vlaneseq
        %v333 = vshrl.u32 %v332, 7
        %v334 = vlaneseq
        %v335 = vand.u32 %v334, 127
        %s336 = smul.u32 %s331, 8
        %v337 = vstv %s336
        %v338 = vadd.s32 %v337, %v333
        %v339 = vmul.u32 %v338, 128
        %v340 = vadd.s32 %v339, %v335
        %vm341 = vcmp.lt.s32.totalorder %v340, 256
        %v342 = vsel %vm341, %v330, 0.0
        %v343 = vsel %vm341, %v327, 0.0
        %v344 = vld [vmem:[%s264] sm:$0xff]
        %v345 = vadd.f32 %v342, 0.0
        %v346 = vadd.f32 %v344, %v345
        %347 = vst [vmem:[%s264] sm:$0xff] %v346
        %v348 = vld [vmem:[%s271] sm:$0xff]
        %v349 = vadd.f32 %v343, 0.0
        %v350 = vadd.f32 %v348, %v349
        %351 = vst [vmem:[%s271] sm:$0xff] %v350
        %s352 = sand.u32 %s116, 1
        %s353 = scalar_lea.sflag [#allocation4], %s352
        %s354 = sand.u32 %s116, 1
        %s355 = smul.addr %s354, 8
        %s356 = scalar_lea.vmem [#allocation7], %s355
        %s357 = sand.u32 %s144, 1
        %s358 = scalar_lea.sflag [#allocation9], %s357
        %s359 = sand.u32 %s144, 1
        %s360 = smul.addr %s359, 8
        %s361 = scalar_lea.vmem [#allocation8], %s360
        // Predicated region
        $region41: #{tpu_custom_call.1} parent=27 // pred_check
          %p362 = pneg %p126
        $region42: #{tpu_custom_call.1} parent=27 // pred_check_branch
          %364 = sbr.rel (%p362) target = $region44
        $region43: #{tpu_custom_call.1} parent=27 // pred_region
          %s366 = ssub.s32 128, 128
          %367 = vsyncadd %s353, %s366
          %s368 = sadd.s32 %s33, %s32
          %s369 = smul.addr %s368, 128
          %s370 = scalar_lea.hbm %s2, %s369
          %s372 = sshll.u32 %s356, 4
          %s373 = int_to_ptr.vmem [resolvable:$true] %s372
          %375 = dma.vmem_to_hbm [thread:$0]  %s373, 128, %s370, %s353
        $region44: #{tpu_custom_call.1} parent=27 // pred_fallthru
          _
        // Predicated region
        $region45: #{tpu_custom_call.1} parent=27 // pred_check
          %p376 = pneg %p154
        $region46: #{tpu_custom_call.1} parent=27 // pred_check_branch
          %378 = sbr.rel (%p376) target = $region48
        $region47: #{tpu_custom_call.1} parent=27 // pred_region
          %s380 = ssub.s32 128, 128
          %381 = vsyncadd %s358, %s380
          %s382 = sadd.s32 %s33, %s32
          %s383 = smul.addr %s382, 128
          %s384 = scalar_lea.hbm %s3, %s383
          %s386 = sshll.u32 %s361, 4
          %s387 = int_to_ptr.vmem [resolvable:$true] %s386
          %389 = dma.vmem_to_hbm [thread:$0]  %s387, 128, %s384, %s358
        $region48: #{tpu_custom_call.1} parent=27 // pred_fallthru
          _
      $region28: #{tpu_custom_call.1} parent=5 // pred_fallthru
        _
      %p390 = scmp.le.s32.totalorder 2, %s22
      // Predicated region
      $region49: #{tpu_custom_call.1} parent=5 // pred_check
        %p391 = pneg %p390
      $region50: #{tpu_custom_call.1} parent=5 // pred_check_branch
        %393 = sbr.rel (%p391) target = $region52
      $region51: #{tpu_custom_call.1} parent=5 // pred_region
        %s394 = ssub.s32 %s22, 2
        // Predicated region
        $region53: #{tpu_custom_call.1} parent=51 // pred_check
          %p395 = pneg %p132
        $region54: #{tpu_custom_call.1} parent=51 // pred_check_branch
          %397 = sbr.rel (%p395) target = $region56
        $region55: #{tpu_custom_call.1} parent=51 // pred_region
          %s398 = sand.u32 %s117, 1
          %s399 = scalar_lea.sflag [#allocation4], %s398
          %s400 = sand.u32 %s117, 1
          %s401 = smul.addr %s400, 8
          %s402 = scalar_lea.vmem [#allocation7], %s401
          %403 = dma.done %s399, 128
        $region56: #{tpu_custom_call.1} parent=51 // pred_fallthru
          _
        // Predicated region
        $region57: #{tpu_custom_call.1} parent=51 // pred_check
          %p404 = pneg %p160
        $region58: #{tpu_custom_call.1} parent=51 // pred_check_branch
          %406 = sbr.rel (%p404) target = $region60
        $region59: #{tpu_custom_call.1} parent=51 // pred_region
          %s407 = sand.u32 %s145, 1
          %s408 = scalar_lea.sflag [#allocation9], %s407
          %s409 = sand.u32 %s145, 1
          %s410 = smul.addr %s409, 8
          %s411 = scalar_lea.vmem [#allocation8], %s410
          %412 = dma.done %s408, 128
        $region60: #{tpu_custom_call.1} parent=51 // pred_fallthru
          _
      $region52: #{tpu_custom_call.1} parent=5 // pred_fallthru
        _
    $region6: #{tpu_custom_call.1} parent=1 // loop_footer
      %s26 = sadd.s32 1, %s22
    $region7: #{tpu_custom_call.1} parent=1 // loop_footer_branch
      %21 = sbr.rel target = $region3
    $region8: #{tpu_custom_call.1} parent=1 // loop_exit
      _
    %413 = vsyncpa [#allocation3], 1
    %s414 = scalar_lea.sflag [#allocation3], 1
    %415 = vsyncpa %s414, 1
    %416 = vsyncpa [#allocation6], 1
    %s417 = scalar_lea.sflag [#allocation6], 1
    %418 = vsyncpa %s417, 1
    %419 = vsyncpa [#allocation4], 1
    %s420 = scalar_lea.sflag [#allocation4], 1
    %421 = vsyncpa %s420, 1
    %422 = vsyncpa [#allocation9], 1
    %s423 = scalar_lea.sflag [#allocation9], 1
    %424 = vsyncpa %s423, 1

</llo_original>
